<compile_context>
chip_gen: v7x
topology: tpu7x:2x2x1
jax: 0.10.0
libtpu: 0.0.40
codegen_flags: <defaults>
</compile_context>

<pallas_src>
import functools

import jax
import jax.numpy as jnp
from jax.experimental import pallas as pl
from jax.experimental.pallas import tpu as pltpu

Q = 0.7  # GCELoss(q=0.7)


def _round_up(x, m):
    return ((x + m - 1) // m) * m


def _tpu_vmem_capacity_bytes():
    """(capacity_bytes, detected) -- conservative 64 MiB fallback if query fails."""
    try:
        return int(pltpu.get_tpu_info().vmem_capacity_bytes), True
    except Exception:
        return 64 * 1024 * 1024, False


def _choose_tile_n(n, c, itemsize, vmem_limit_bytes):
    """Largest row tile whose full pipeline footprint fits the VMEM budget."""
    sub = 8 if itemsize >= 4 else 16            # sublane granule (f32 / bf16)
    usable = int(vmem_limit_bytes * 0.70)       # headroom for out blocks / scratch
    per_row = (
        2 * c * itemsize                        # logits block, double-buffered
        + 3 * c * 4                             # f32 upcast + exp + iota/select temps
        + 2 * 128 * 4                           # (tn,1) int32 targets: padded to a
    )                                           #   full 128-lane row, double-buffered
    tn = max(sub, (usable // per_row) // sub * sub)
    return min(tn, _round_up(n, sub))


def gce_loss_kernel(logits_ref, targets_ref, out_ref, *, q, n_rows, tile_n,
                    use_mxu_denom):
    i = pl.program_id(0)

    x = logits_ref[...].astype(jnp.float32)                    # (tn, C)
    tgt = targets_ref[...]                                      # (tn, 1) int32

    # Numerically stable softmax *statistics* only (no full prob matrix).
    m = jnp.max(x, axis=-1, keepdims=True)                      # (tn, 1)
    e = jnp.exp(x - m)                                          # (tn, C)
    if use_mxu_denom:
        # v7x-class chips: move the wide lane-reduce off the VPU/XLU onto the
        # otherwise idle MXU (ones is a splat constant -> essentially free).
        ones = jnp.ones((x.shape[-1], 128), jnp.float32)
        denom = jnp.dot(e, ones, preferred_element_type=jnp.float32)[:, :1]
    else:
        denom = jnp.sum(e, axis=-1, keepdims=True)              # (tn, 1)

    # Gather the target-class logit via an iota==target one-hot mask.
    # TODO(synk): out-of-range / negative targets silently give x_t = 0 rather
    # than raising like torch.gather.
    col = jax.lax.broadcasted_iota(jnp.int32, x.shape, 1)       # (tn, C)
    x_t = jnp.sum(jnp.where(col == tgt, x, 0.0), axis=-1, keepdims=True)

    # Log-domain: p_t^q = exp(q * log p_t); two EUP ops on the (tn, 1) column.
    log_p_t = x_t - m - jnp.log(denom)                          # (tn, 1)
    loss = (1.0 - jnp.exp(q * log_p_t)) * (1.0 / q)             # (tn, 1)

    # Mask rows past N (ragged last tile of the cdiv grid).  Applied after all
    # per-row reductions so garbage in padded rows can never leak into valid rows.
    row = i * tile_n + jax.lax.broadcasted_iota(jnp.int32, loss.shape, 0)
    loss = jnp.where(row < n_rows, loss, 0.0)

    # Per-tile partial sum splatted across the whole lane-dense (1, 8, 128)
    # block -> a single unmasked full-vreg store; wrapper reads [:, 0, 0].
    partial = jnp.sum(loss)
    out_ref[...] = jnp.broadcast_to(partial, out_ref.shape).astype(out_ref.dtype)


def gce_loss(logits, targets, q=Q, tile_n=None):
    """Pallas GCE loss. logits: [N, C] float (f32 or bf16), targets: [N] ints.

    Returns a scalar float32: sum over rows of (1 - softmax(logits)[target]^q) / q.
    """
    n, c = logits.shape
    itemsize = jnp.dtype(logits.dtype).itemsize

    cap, cap_known = _tpu_vmem_capacity_bytes()
    # ~48 MiB scoped on v7x (64 MiB physical), 96 MiB on v5e/v6e (128 MiB).
    vmem_limit = min(cap * 3 // 4, 96 * 1024 * 1024)
    if tile_n is None:
        tile_n = _choose_tile_n(n, c, itemsize, vmem_limit)
    num_tiles = pl.cdiv(n, tile_n)
    targets2d = targets.astype(jnp.int32).reshape(n, 1)

    # MXU denominator offload only where the VPU is the likely binding slot
    # (v7x-class: small VMEM <-> 3.2 TB/s HBM) and C is MXU/lane friendly.
    use_mxu_denom = cap_known and cap <= 80 * 1024 * 1024 and c % 128 == 0 and c <= 4096

    # TODO(synk): for C not a multiple of 128 (or tiny C like 32) lane
    # utilization is poor; a wrapper-side -inf pad / small-C row-packing path
    # would help but costs an extra HBM pass, so it is not done here.
    partials = pl.pallas_call(
        functools.partial(gce_loss_kernel, q=q, n_rows=n, tile_n=tile_n,
                          use_mxu_denom=use_mxu_denom),
        out_shape=jax.ShapeDtypeStruct((num_tiles, 8, 128), jnp.float32),
        grid_spec=pltpu.PrefetchScalarGridSpec(
            num_scalar_prefetch=0,
            grid=(num_tiles,),
            in_specs=[
                pl.BlockSpec((tile_n, c), lambda i: (i, 0)),
                pl.BlockSpec((tile_n, 1), lambda i: (i, 0)),
            ],
            out_specs=pl.BlockSpec((1, 8, 128), lambda i: (i, 0, 0)),
        ),
        compiler_params=pltpu.CompilerParams(
            # TODO(synk): verify in an xprof trace that "parallel" shards the
            # grid across both TensorCores on v7x; if not, switch to
            # pltpu.CORE_PARALLEL / an explicit core_map split.
            dimension_semantics=("parallel",),
            vmem_limit_bytes=vmem_limit,
        ),
    )(logits, targets2d)
    # Every element of block i holds partial_i; take one lane per tile and sum.
    return jnp.sum(partials[:, 0, 0])


def gce_loss_ref(logits, targets, q=Q):
    """Pure-JAX reference mirroring the PyTorch module."""
    pred = jax.nn.softmax(logits.astype(jnp.float32), axis=-1)
    p_t = jnp.take_along_axis(pred, targets[:, None].astype(jnp.int32), axis=-1)
    return jnp.sum((1.0 - p_t ** q) / q)


if __name__ == "__main__":
    key = jax.random.PRNGKey(0)
    k1, k2 = jax.random.split(key)

    N, C = 64, 32  # small shapes: 64 samples, 32 classes
    logits = jax.random.normal(k1, (N, C), dtype=jnp.float32)
    targets = jax.random.randint(k2, (N,), 0, C, dtype=jnp.int32)

    loss = jax.block_until_ready(gce_loss(logits, targets))
    ref = gce_loss_ref(logits, targets)
    assert jnp.allclose(loss, ref, rtol=1e-3, atol=1e-3), (loss, ref)

    # Ragged case: N not a multiple of tile_n exercises the cdiv grid + row mask.
    loss2 = jax.block_until_ready(gce_loss(logits[:56], targets[:56], tile_n=16))
    ref2 = gce_loss_ref(logits[:56], targets[:56])
    assert jnp.allclose(loss2, ref2, rtol=1e-3, atol=1e-3), (loss2, ref2)

    # bf16 logits exercise the post-DMA f32 upcast path and the bf16 sublane granule.
    logits_bf16 = logits.astype(jnp.bfloat16)
    loss3 = jax.block_until_ready(gce_loss(logits_bf16, targets))
    ref3 = gce_loss_ref(logits_bf16, targets)
    assert jnp.allclose(loss3, ref3, rtol=1e-3, atol=1e-3), (loss3, ref3)

    print("KERNEL_OK")
</pallas_src>

<mosaic_0001>
module attributes {stable_mosaic.version = 11 : i64} {
  func.func @gce_loss_kernel(%arg0: i32, %arg1: memref<64x32xf32, #tpu.memory_space<vmem>>, %arg2: memref<64x1xi32, #tpu.memory_space<vmem>>, %arg3: memref<1x8x128xf32, #tpu.memory_space<vmem>>) attributes {dimension_semantics = [#tpu.dimension_semantics<parallel>], iteration_bounds = array<i64: 1>, scalar_prefetch = 0 : i64, scratch_operands = 0 : i64, tpu.core_type = #tpu.core_type<tc>, window_params = [{transform_indices = @transform_0, window_bounds = array<i64: 64, 32>}, {transform_indices = @transform_1, window_bounds = array<i64: 64, 1>}, {transform_indices = @transform_2, window_bounds = array<i64: 1, 8, 128>}]} {
    %c0 = arith.constant 0 : index
    %c0_0 = arith.constant 0 : index
    %0 = vector.load %arg1[%c0, %c0_0] : memref<64x32xf32, #tpu.memory_space<vmem>>, vector<64x32xf32>
    %c0_1 = arith.constant 0 : index
    %c0_2 = arith.constant 0 : index
    %1 = vector.load %arg2[%c0_1, %c0_2] : memref<64x1xi32, #tpu.memory_space<vmem>>, vector<64x1xi32>
    %cst = arith.constant dense<0xFF800000> : vector<64xf32>
    %2 = vector.multi_reduction <maximumf>, %0, %cst [1] : vector<64x32xf32> to vector<64xf32>
    %3 = vector.shape_cast %2 : vector<64xf32> to vector<64x1xf32>
    %4 = vector.broadcast %3 : vector<64x1xf32> to vector<64x32xf32>
    %5 = arith.subf %0, %4 : vector<64x32xf32>
    %6 = math.exp %5 : vector<64x32xf32>
    %cst_3 = arith.constant dense<0.000000e+00> : vector<64xf32>
    %7 = vector.multi_reduction <add>, %6, %cst_3 [1] : vector<64x32xf32> to vector<64xf32>
    %8 = vector.shape_cast %7 : vector<64xf32> to vector<64x1xf32>
    %9 = tpu.iota {dimensions = array<i32: 1>} : vector<64x32xi32>
    %10 = vector.broadcast %1 : vector<64x1xi32> to vector<64x32xi32>
    %11 = arith.cmpi eq, %9, %10 : vector<64x32xi32>
    %cst_4 = arith.constant 0.000000e+00 : f32
    %12 = vector.broadcast %cst_4 : f32 to vector<64x32xf32>
    %13 = arith.select %11, %0, %12 : vector<64x32xi1>, vector<64x32xf32>
    %cst_5 = arith.constant dense<0.000000e+00> : vector<64xf32>
    %14 = vector.multi_reduction <add>, %13, %cst_5 [1] : vector<64x32xf32> to vector<64xf32>
    %15 = vector.shape_cast %14 : vector<64xf32> to vector<64x1xf32>
    %16 = arith.subf %15, %3 : vector<64x1xf32>
    %17 = math.log %8 : vector<64x1xf32>
    %18 = arith.subf %16, %17 : vector<64x1xf32>
    %cst_6 = arith.constant 0.699999988 : f32
    %19 = vector.broadcast %cst_6 : f32 to vector<64x1xf32>
    %20 = arith.mulf %19, %18 : vector<64x1xf32>
    %21 = math.exp %20 : vector<64x1xf32>
    %cst_7 = arith.constant 1.000000e+00 : f32
    %22 = vector.broadcast %cst_7 : f32 to vector<64x1xf32>
    %23 = arith.subf %22, %21 : vector<64x1xf32>
    %cst_8 = arith.constant 1.42857146 : f32
    %24 = vector.broadcast %cst_8 : f32 to vector<64x1xf32>
    %25 = arith.mulf %23, %24 : vector<64x1xf32>
    %c64_i32 = arith.constant 64 : i32
    %26 = arith.muli %arg0, %c64_i32 : i32
    %27 = tpu.iota {dimensions = array<i32: 0>} : vector<64x1xi32>
    %28 = vector.broadcast %26 : i32 to vector<64x1xi32>
    %29 = arith.addi %28, %27 : vector<64x1xi32>
    %c64_i32_9 = arith.constant 64 : i32
    %30 = vector.broadcast %c64_i32_9 : i32 to vector<64x1xi32>
    %31 = arith.cmpi slt, %29, %30 : vector<64x1xi32>
    %cst_10 = arith.constant 0.000000e+00 : f32
    %32 = vector.broadcast %cst_10 : f32 to vector<64x1xf32>
    %33 = arith.select %31, %25, %32 : vector<64x1xi1>, vector<64x1xf32>
    %34 = vector.shape_cast %33 : vector<64x1xf32> to vector<1x64x1xf32>
    %cst_11 = arith.constant dense<0.000000e+00> : vector<1xf32>
    %35 = vector.multi_reduction <add>, %34, %cst_11 [1, 2] : vector<1x64x1xf32> to vector<1xf32>
    %36 = vector.shape_cast %35 : vector<1xf32> to vector<1x1x1xf32>
    %37 = vector.extract %36[0, 0, 0] : f32 from vector<1x1x1xf32>
    %38 = vector.broadcast %37 : f32 to vector<1x8x128xf32>
    %c0_12 = arith.constant 0 : index
    %c0_13 = arith.constant 0 : index
    %c0_14 = arith.constant 0 : index
    %39 = vector.load %arg3[%c0_12, %c0_13, %c0_14] : memref<1x8x128xf32, #tpu.memory_space<vmem>>, vector<1x8x128xf32>
    tpu.vector_store %arg3[%c0_12, %c0_13, %c0_14], %38 {strides = array<i32>} : memref<1x8x128xf32, #tpu.memory_space<vmem>>, vector<1x8x128xf32>,
    return
  }
  func.func @transform_0(%arg0: i32) -> (i32, i32) {
    %c0_i32 = arith.constant 0 : i32
    %c0_i32_0 = arith.constant 0 : i32
    return %arg0, %c0_i32 : i32, i32
  }
  func.func @transform_1(%arg0: i32) -> (i32, i32) {
    %c0_i32 = arith.constant 0 : i32
    %c0_i32_0 = arith.constant 0 : i32
    return %arg0, %c0_i32 : i32, i32
  }
  func.func @transform_2(%arg0: i32) -> (i32, i32, i32) {
    %c0_i32 = arith.constant 0 : i32
    %c0_i32_0 = arith.constant 0 : i32
    %c0_i32_1 = arith.constant 0 : i32
    return %arg0, %c0_i32, %c0_i32_0 : i32, i32, i32
  }
}

</mosaic_0001>

<llo_original>
// kernel: tpu_custom_call.1
$region0: #{tpu_custom_call.1}
  #allocation0 [shape = 'u32[]', space=smem, size = 0x4, offset = 0x4, fixed_abs, tag = 'smem constant byte address 0x4 - core index']
  #allocation1 [shape = 'u32[144,128]{1,0:T(1,128)}', space=vmem, size = 0x12000, scoped, tag = 'internal scratch']
  %s0 = inlined_call_operand.vmem [shape: f32[64,32], index: 0, kind: input, shape index: {}]
  %s1 = inlined_call_operand.vmem [shape: s32[64,1], index: 1, kind: input, shape index: {}]
  %s2 = inlined_call_operand.hbm [shape: f32[1,8,128], index: 2, kind: output, shape index: {}]
  %s3 = sld [smem:[#allocation0]]
  $region18: #{tpu_custom_call.1} parent=0
    _
  %s5 = ssub.s32 1, %s3
  %s6 = scalar_select 0, %s5, %s3
  $region1: #{tpu_custom_call.1} parent=0
    #allocation2 [shape = 'u8[4096]{0}', space=vmem, size = 0x1000, scoped, tag = 'output window, operand 0, single buffered']
    #allocation3 [shape = 's32[1]{0}', space=sflag, size = 0x4, scoped, tag = 'scoped memory for tpu_custom_call.1']
    %7 = vsyncpa [#allocation3], 0
    // Predicated region
    $region2: #{tpu_custom_call.1} parent=1 // pred_check
      _
    $region3: #{tpu_custom_call.1} parent=1 // pred_check_branch
      %9 = sbr.rel (0) target = $region5
    $region4: #{tpu_custom_call.1} parent=1 // pred_region
      _
    $region5: #{tpu_custom_call.1} parent=1 // pred_fallthru
      _
    // Predicated region
    $region6: #{tpu_custom_call.1} parent=1 // pred_check
      _
    $region7: #{tpu_custom_call.1} parent=1 // pred_check_branch
      %11 = sbr.rel (0) target = $region9
    $region8: #{tpu_custom_call.1} parent=1 // pred_region
      _
    $region9: #{tpu_custom_call.1} parent=1 // pred_fallthru
      _
    %v12 = vld [vmem:[%s0] sm:$0xff]
    %v13 = vld [vmem:[%s0 + $0x8] sm:$0xff]
    %v14 = vld [vmem:[%s0 + $0x10] sm:$0xff]
    %v15 = vld [vmem:[%s0 + $0x18] sm:$0xff]
    %v16 = vld [vmem:[%s0 + $0x20] sm:$0xff]
    %v17 = vld [vmem:[%s0 + $0x28] sm:$0xff]
    %v18 = vld [vmem:[%s0 + $0x30] sm:$0xff]
    %v19 = vld [vmem:[%s0 + $0x38] sm:$0xff]
    %v20 = vld [vmem:[%s1] sm:$0xff]
    %v21 = vld [vmem:[%s1 + $0x8] sm:$0xff]
    %v22 = vld [vmem:[%s1 + $0x10] sm:$0xff]
    %v23 = vld [vmem:[%s1 + $0x18] sm:$0xff]
    %v24 = vld [vmem:[%s1 + $0x20] sm:$0xff]
    %v25 = vld [vmem:[%s1 + $0x28] sm:$0xff]
    %v26 = vld [vmem:[%s1 + $0x30] sm:$0xff]
    %v27 = vld [vmem:[%s1 + $0x38] sm:$0xff]
    %vm28 = vcmask 261120
    %v29 = vsel %vm28, %v12, -inf
    %30 = vmax.xlane.f32.xlu0 %v29
    %v31 = vpop.xlane.xlu0 %30
    %v32 = vsel %vm28, %v13, -inf
    %33 = vmax.xlane.f32.xlu0 %v32
    %v34 = vpop.xlane.xlu0 %33
    %v35 = vsel %vm28, %v14, -inf
    %36 = vmax.xlane.f32.xlu0 %v35
    %v37 = vpop.xlane.xlu0 %36
    %v38 = vsel %vm28, %v15, -inf
    %39 = vmax.xlane.f32.xlu0 %v38
    %v40 = vpop.xlane.xlu0 %39
    %v41 = vsel %vm28, %v16, -inf
    %42 = vmax.xlane.f32.xlu0 %v41
    %v43 = vpop.xlane.xlu0 %42
    %v44 = vsel %vm28, %v17, -inf
    %45 = vmax.xlane.f32.xlu0 %v44
    %v46 = vpop.xlane.xlu0 %45
    %v47 = vsel %vm28, %v18, -inf
    %48 = vmax.xlane.f32.xlu0 %v47
    %v49 = vpop.xlane.xlu0 %48
    %v50 = vsel %vm28, %v19, -inf
    %51 = vmax.xlane.f32.xlu0 %v50
    %v52 = vpop.xlane.xlu0 %51
    %v53 = vsub.f32 %v12, %v31
    %v54 = vsub.f32 %v13, %v34
    %v55 = vsub.f32 %v14, %v37
    %v56 = vsub.f32 %v15, %v40
    %v57 = vsub.f32 %v16, %v43
    %v58 = vsub.f32 %v17, %v46
    %v59 = vsub.f32 %v18, %v49
    %v60 = vsub.f32 %v19, %v52
    %v61 = vmul.f32 %v53, 1.442695
    %v62 = vpow.pop %v61
    %v63 = vmul.f32 %v54, 1.442695
    %v64 = vpow.pop %v63
    %v65 = vmul.f32 %v55, 1.442695
    %v66 = vpow.pop %v65
    %v67 = vmul.f32 %v56, 1.442695
    %v68 = vpow.pop %v67
    %v69 = vmul.f32 %v57, 1.442695
    %v70 = vpow.pop %v69
    %v71 = vmul.f32 %v58, 1.442695
    %v72 = vpow.pop %v71
    %v73 = vmul.f32 %v59, 1.442695
    %v74 = vpow.pop %v73
    %v75 = vmul.f32 %v60, 1.442695
    %v76 = vpow.pop %v75
    %v77 = vsel %vm28, %v62, 0.0
    %78 = vadd.xlane.f32.xlu0 %v77
    %v79 = vpop.xlane.xlu0 %78
    %v80 = vsel %vm28, %v64, 0.0
    %81 = vadd.xlane.f32.xlu0 %v80
    %v82 = vpop.xlane.xlu0 %81
    %v83 = vsel %vm28, %v66, 0.0
    %84 = vadd.xlane.f32.xlu0 %v83
    %v85 = vpop.xlane.xlu0 %84
    %v86 = vsel %vm28, %v68, 0.0
    %87 = vadd.xlane.f32.xlu0 %v86
    %v88 = vpop.xlane.xlu0 %87
    %v89 = vsel %vm28, %v70, 0.0
    %90 = vadd.xlane.f32.xlu0 %v89
    %v91 = vpop.xlane.xlu0 %90
    %v92 = vsel %vm28, %v72, 0.0
    %93 = vadd.xlane.f32.xlu0 %v92
    %v94 = vpop.xlane.xlu0 %93
    %v95 = vsel %vm28, %v74, 0.0
    %96 = vadd.xlane.f32.xlu0 %v95
    %v97 = vpop.xlane.xlu0 %96
    %v98 = vsel %vm28, %v76, 0.0
    %99 = vadd.xlane.f32.xlu0 %v98
    %v100 = vpop.xlane.xlu0 %99
    %v101 = vlaneseq
    %v102 = vand.u32 %v101, 127
    %103 = vset.pattern.permute.xlu0 0
    %104 = vperm.xlu0 %103, %v20
    %v105 = vpop.permute.xlu0 %104
    %106 = vset.pattern.permute.xlu0 0
    %107 = vperm.xlu0 %106, %v21
    %v108 = vpop.permute.xlu0 %107
    %109 = vset.pattern.permute.xlu0 0
    %110 = vperm.xlu0 %109, %v22
    %v111 = vpop.permute.xlu0 %110
    %112 = vset.pattern.permute.xlu0 0
    %113 = vperm.xlu0 %112, %v23
    %v114 = vpop.permute.xlu0 %113
    %115 = vset.pattern.permute.xlu0 0
    %116 = vperm.xlu0 %115, %v24
    %v117 = vpop.permute.xlu0 %116
    %118 = vset.pattern.permute.xlu0 0
    %119 = vperm.xlu0 %118, %v25
    %v120 = vpop.permute.xlu0 %119
    %121 = vset.pattern.permute.xlu0 0
    %122 = vperm.xlu0 %121, %v26
    %v123 = vpop.permute.xlu0 %122
    %124 = vset.pattern.permute.xlu0 0
    %125 = vperm.xlu0 %124, %v27
    %v126 = vpop.permute.xlu0 %125
    %vm127 = vcmp.eq.s32.totalorder %v102, %v105
    %vm128 = vcmp.eq.s32.totalorder %v102, %v108
    %vm129 = vcmp.eq.s32.totalorder %v102, %v111
    %vm130 = vcmp.eq.s32.totalorder %v102, %v114
    %vm131 = vcmp.eq.s32.totalorder %v102, %v117
    %vm132 = vcmp.eq.s32.totalorder %v102, %v120
    %vm133 = vcmp.eq.s32.totalorder %v102, %v123
    %vm134 = vcmp.eq.s32.totalorder %v102, %v126
    %v135 = vsel %vm127, %v12, 0.0
    %v136 = vsel %vm128, %v13, 0.0
    %v137 = vsel %vm129, %v14, 0.0
    %v138 = vsel %vm130, %v15, 0.0
    %v139 = vsel %vm131, %v16, 0.0
    %v140 = vsel %vm132, %v17, 0.0
    %v141 = vsel %vm133, %v18, 0.0
    %v142 = vsel %vm134, %v19, 0.0
    %v143 = vsel %vm28, %v135, 0.0
    %144 = vadd.xlane.f32.xlu0 %v143
    %v145 = vpop.xlane.xlu0 %144
    %v146 = vsel %vm28, %v136, 0.0
    %147 = vadd.xlane.f32.xlu0 %v146
    %v148 = vpop.xlane.xlu0 %147
    %v149 = vsel %vm28, %v137, 0.0
    %150 = vadd.xlane.f32.xlu0 %v149
    %v151 = vpop.xlane.xlu0 %150
    %v152 = vsel %vm28, %v138, 0.0
    %153 = vadd.xlane.f32.xlu0 %v152
    %v154 = vpop.xlane.xlu0 %153
    %v155 = vsel %vm28, %v139, 0.0
    %156 = vadd.xlane.f32.xlu0 %v155
    %v157 = vpop.xlane.xlu0 %156
    %v158 = vsel %vm28, %v140, 0.0
    %159 = vadd.xlane.f32.xlu0 %v158
    %v160 = vpop.xlane.xlu0 %159
    %v161 = vsel %vm28, %v141, 0.0
    %162 = vadd.xlane.f32.xlu0 %v161
    %v163 = vpop.xlane.xlu0 %162
    %v164 = vsel %vm28, %v142, 0.0
    %165 = vadd.xlane.f32.xlu0 %v164
    %v166 = vpop.xlane.xlu0 %165
    %v167 = vsub.f32 %v145, %v31
    %v168 = vsub.f32 %v148, %v34
    %v169 = vsub.f32 %v151, %v37
    %v170 = vsub.f32 %v154, %v40
    %v171 = vsub.f32 %v157, %v43
    %v172 = vsub.f32 %v160, %v46
    %v173 = vsub.f32 %v163, %v49
    %v174 = vsub.f32 %v166, %v52
    %v175 = vlog2.pop %v79
    %v176 = vmul.f32 %v175, 0.6931472
    %v177 = vlog2.pop %v82
    %v178 = vmul.f32 %v177, 0.6931472
    %v179 = vlog2.pop %v85
    %v180 = vmul.f32 %v179, 0.6931472
    %v181 = vlog2.pop %v88
    %v182 = vmul.f32 %v181, 0.6931472
    %v183 = vlog2.pop %v91
    %v184 = vmul.f32 %v183, 0.6931472
    %v185 = vlog2.pop %v94
    %v186 = vmul.f32 %v185, 0.6931472
    %v187 = vlog2.pop %v97
    %v188 = vmul.f32 %v187, 0.6931472
    %v189 = vlog2.pop %v100
    %v190 = vmul.f32 %v189, 0.6931472
    %v191 = vsub.f32 %v167, %v176
    %v192 = vsub.f32 %v168, %v178
    %v193 = vsub.f32 %v169, %v180
    %v194 = vsub.f32 %v170, %v182
    %v195 = vsub.f32 %v171, %v184
    %v196 = vsub.f32 %v172, %v186
    %v197 = vsub.f32 %v173, %v188
    %v198 = vsub.f32 %v174, %v190
    %v199 = vmul.f32 %v191, 0.7
    %v200 = vmul.f32 %v192, 0.7
    %v201 = vmul.f32 %v193, 0.7
    %v202 = vmul.f32 %v194, 0.7
    %v203 = vmul.f32 %v195, 0.7
    %v204 = vmul.f32 %v196, 0.7
    %v205 = vmul.f32 %v197, 0.7
    %v206 = vmul.f32 %v198, 0.7
    %v207 = vmul.f32 %v199, 1.442695
    %v208 = vpow.pop %v207
    %v209 = vmul.f32 %v200, 1.442695
    %v210 = vpow.pop %v209
    %v211 = vmul.f32 %v201, 1.442695
    %v212 = vpow.pop %v211
    %v213 = vmul.f32 %v202, 1.442695
    %v214 = vpow.pop %v213
    %v215 = vmul.f32 %v203, 1.442695
    %v216 = vpow.pop %v215
    %v217 = vmul.f32 %v204, 1.442695
    %v218 = vpow.pop %v217
    %v219 = vmul.f32 %v205, 1.442695
    %v220 = vpow.pop %v219
    %v221 = vmul.f32 %v206, 1.442695
    %v222 = vpow.pop %v221
    %v223 = vsub.f32 1.0, %v208
    %v224 = vsub.f32 1.0, %v210
    %v225 = vsub.f32 1.0, %v212
    %v226 = vsub.f32 1.0, %v214
    %v227 = vsub.f32 1.0, %v216
    %v228 = vsub.f32 1.0, %v218
    %v229 = vsub.f32 1.0, %v220
    %v230 = vsub.f32 1.0, %v222
    %v231 = vmul.f32 %v223, 1.4285715
    %v232 = vmul.f32 %v224, 1.4285715
    %v233 = vmul.f32 %v225, 1.4285715
    %v234 = vmul.f32 %v226, 1.4285715
    %v235 = vmul.f32 %v227, 1.4285715
    %v236 = vmul.f32 %v228, 1.4285715
    %v237 = vmul.f32 %v229, 1.4285715
    %v238 = vmul.f32 %v230, 1.4285715
    %s239 = smul.u32 0, 64
    %v240 = vlaneseq
    %v241 = vshrl.u32 %v240, 7
    %v242 = vadd.s32 %v241, 8
    %v243 = vadd.s32 %v241, 16
    %v244 = vadd.s32 %v241, 24
    %v245 = vadd.s32 %v241, 32
    %v246 = vadd.s32 %v241, 40
    %v247 = vadd.s32 %v241, 48
    %v248 = vadd.s32 %v241, 56
    %v249 = vstv %s239
    %v250 = vadd.s32 %v249, %v241
    %v251 = vadd.s32 %v249, %v242
    %v252 = vadd.s32 %v249, %v243
    %v253 = vadd.s32 %v249, %v244
    %v254 = vadd.s32 %v249, %v245
    %v255 = vadd.s32 %v249, %v246
    %v256 = vadd.s32 %v249, %v247
    %v257 = vadd.s32 %v249, %v248
    %vm258 = vcmp.lt.s32.totalorder %v250, 64
    %vm259 = vcmp.lt.s32.totalorder %v251, 64
    %vm260 = vcmp.lt.s32.totalorder %v252, 64
    %vm261 = vcmp.lt.s32.totalorder %v253, 64
    %vm262 = vcmp.lt.s32.totalorder %v254, 64
    %vm263 = vcmp.lt.s32.totalorder %v255, 64
    %vm264 = vcmp.lt.s32.totalorder %v256, 64
    %vm265 = vcmp.lt.s32.totalorder %v257, 64
    %v266 = vsel %vm258, %v231, 0.0
    %v267 = vsel %vm259, %v232, 0.0
    %v268 = vsel %vm260, %v233, 0.0
    %v269 = vsel %vm261, %v234, 0.0
    %v270 = vsel %vm262, %v235, 0.0
    %v271 = vsel %vm263, %v236, 0.0
    %v272 = vsel %vm264, %v237, 0.0
    %v273 = vsel %vm265, %v238, 0.0
    %vm274 = vcmask 7168
    %v275 = vsel %vm274, %v266, 0.0
    %v276 = vsel %vm274, %v267, 0.0
    %v277 = vadd.f32 %v275, %v276
    %v278 = vsel %vm274, %v268, 0.0
    %v279 = vadd.f32 %v277, %v278
    %v280 = vsel %vm274, %v269, 0.0
    %v281 = vadd.f32 %v279, %v280
    %v282 = vsel %vm274, %v270, 0.0
    %v283 = vadd.f32 %v281, %v282
    %v284 = vsel %vm274, %v271, 0.0
    %v285 = vadd.f32 %v283, %v284
    %v286 = vsel %vm274, %v272, 0.0
    %v287 = vadd.f32 %v285, %v286
    %v288 = vsel %vm274, %v273, 0.0
    %v289 = vadd.f32 %v287, %v288
    %290 = vadd.xlane.f32.xlu0 %v289
    %v291 = vpop.xlane.xlu0 %290
    %v292 = vrot.slane %v291, 4
    %v293 = vadd.f32 %v291, %v292
    %v294 = vrot.slane %v293, 2
    %v295 = vadd.f32 %v293, %v294
    %v296 = vrot.slane %v295, 1
    %v297 = vadd.f32 %v295, %v296
    %s298 = vtos %v297
    %v299 = vstv %s298
    %300 = vst [vmem:[#allocation2] sm:$0xff] %v299
    // Predicated region
    $region10: #{tpu_custom_call.1} parent=1 // pred_check
      _
    $region11: #{tpu_custom_call.1} parent=1 // pred_check_branch
      %302 = sbr.rel (0) target = $region13
    $region12: #{tpu_custom_call.1} parent=1 // pred_region
      %s304 = ssub.s32 128, 128
      %305 = vsyncadd [#allocation3], %s304
      %s307 = sshll.u32 [#allocation2], 4
      %s308 = int_to_ptr.vmem [resolvable:$true] %s307
      %310 = dma.vmem_to_hbm [thread:$0]  %s308, 128, %s2, [#allocation3]
    $region13: #{tpu_custom_call.1} parent=1 // pred_fallthru
      _
    // Predicated region
    $region14: #{tpu_custom_call.1} parent=1 // pred_check
      _
    $region15: #{tpu_custom_call.1} parent=1 // pred_check_branch
      %312 = sbr.rel (0) target = $region17
    $region16: #{tpu_custom_call.1} parent=1 // pred_region
      %313 = dma.done [#allocation3], 128
    $region17: #{tpu_custom_call.1} parent=1 // pred_fallthru
      _
    %314 = vsyncpa [#allocation3], 1

</llo_original>
